<compile_context>
chip_gen: v7x
topology: tpu7x:2x2x1
jax: 0.10.0
libtpu: 0.0.40
codegen_flags: <defaults>
</compile_context>

<pallas_src>
import jax
import jax.numpy as jnp
from jax.experimental import pallas as pl
from jax.experimental.pallas import tpu as pltpu


def embeddings_kernel(ids_ref, table_hbm, pe_ref, out_ref, gbuf, sems):
    """One grid step = one tile of `rows` flattened (batch*seq) tokens.

    ids_ref:   (N_pad,)   int32  SMEM (scalar prefetch) -- all token ids
    table_hbm: (V, D)     f32    raw HBM ref (memory_space=pl.ANY)
    pe_ref:    (rows, D)  f32    VMEM block -- positional encodings for tile
    out_ref:   (rows, D)  f32    VMEM block -- output tile
    gbuf:      (rows, D)  f32    VMEM scratch -- gathered embedding rows
    sems:      (rows,)           DMA semaphores
    """
    rows = out_ref.shape[0]
    base = pl.program_id(0) * rows

    # 1) Issue all row-gather DMAs: HBM table[token_id] -> VMEM gbuf[r].
    for r in range(rows):
        tok = ids_ref[base + r]
        pltpu.make_async_copy(table_hbm.at[tok], gbuf.at[r], sems.at[r]).start()

    # 2) Wait for all of them.
    for r in range(rows):
        pltpu.make_async_copy(table_hbm.at[0], gbuf.at[r], sems.at[r]).wait()

    # 3) Token embedding + absolute positional embedding.
    #    Eval-mode dropout == identity; .float() == float32 (already f32).
    out_ref[...] = gbuf[...] + pe_ref[...]


def make_sinusoidal_pe(max_len: int, d_model: int) -> jnp.ndarray:
    """Standard 'Attention is All You Need' sinusoidal APE table, (max_len, d_model)."""
    pos = jnp.arange(max_len, dtype=jnp.float32)[:, None]                 # (L, 1)
    i = jnp.arange(0, d_model, 2, dtype=jnp.float32)[None, :]             # (1, D/2)
    div = jnp.exp(-jnp.log(10000.0) * i / d_model)                        # (1, D/2)
    ang = pos * div                                                       # (L, D/2)
    pe = jnp.zeros((max_len, d_model), dtype=jnp.float32)
    pe = pe.at[:, 0::2].set(jnp.sin(ang))
    pe = pe.at[:, 1::2].set(jnp.cos(ang))
    return pe


def embeddings_forward(token_ids: jnp.ndarray,
                       embed_table: jnp.ndarray,
                       pe_table: jnp.ndarray,
                       *,
                       rows_per_tile: int = 8) -> jnp.ndarray:
    """token_ids: (B, S) int32; embed_table: (V, D) f32; pe_table: (max_len, D) f32."""
    B, S = token_ids.shape
    V, D = embed_table.shape
    assert S <= pe_table.shape[0], "sequence length exceeds positional max_len"

    # Flatten (B, S) -> (B*S,) rows so one grid step handles a dense row tile.
    N = B * S
    n_tiles = (N + rows_per_tile - 1) // rows_per_tile
    N_pad = n_tiles * rows_per_tile

    ids_flat = token_ids.reshape(N).astype(jnp.int32)
    pe_flat = jnp.broadcast_to(pe_table[:S][None], (B, S, D)).reshape(N, D)
    if N_pad != N:
        ids_flat = jnp.pad(ids_flat, (0, N_pad - N))            # pad with padding_idx 0
        pe_flat = jnp.pad(pe_flat, ((0, N_pad - N), (0, 0)))

    out_flat = pl.pallas_call(
        embeddings_kernel,
        out_shape=jax.ShapeDtypeStruct((N_pad, D), jnp.float32),
        grid_spec=pltpu.PrefetchScalarGridSpec(
            num_scalar_prefetch=1,                               # ids -> SMEM
            grid=(n_tiles,),
            in_specs=[
                pl.BlockSpec(memory_space=pl.ANY),               # (V, D) table stays in HBM
                pl.BlockSpec((rows_per_tile, D), lambda t, ids: (t, 0)),   # pe tile
            ],
            out_specs=pl.BlockSpec((rows_per_tile, D), lambda t, ids: (t, 0)),
            scratch_shapes=[
                pltpu.VMEM((rows_per_tile, D), jnp.float32),     # gathered rows
                pltpu.SemaphoreType.DMA((rows_per_tile,)),       # one sem per in-flight row DMA
            ],
        ),
        compiler_params=pltpu.CompilerParams(
            dimension_semantics=("parallel",)),
    )(ids_flat, embed_table, pe_flat)

    return out_flat[:N].reshape(B, S, D)


if __name__ == "__main__":
    # config['model']: vocab_size=64, embed_dim=32, max_len=16 ; batch=2, seq=8
    B, S = 2, 8
    V, D, MAX_LEN = 64, 32, 16

    key = jax.random.PRNGKey(0)
    k_tab, k_ids = jax.random.split(key)

    # nn.Embedding(V, D, padding_idx=0): N(0,1) init with padding row zeroed.
    embed_table = jax.random.normal(k_tab, (V, D), dtype=jnp.float32)
    embed_table = embed_table.at[0].set(0.0)

    pe_table = make_sinusoidal_pe(MAX_LEN, D)
    token_ids = jax.random.randint(k_ids, (B, S), minval=0, maxval=V, dtype=jnp.int32)

    # rows_per_tile=8 -> grid of 2 row tiles (keeps both v7x TensorCores busy).
    out = embeddings_forward(token_ids, embed_table, pe_table, rows_per_tile=8)
    out = jax.block_until_ready(out)

    # silent sanity check against a pure-JAX reference (eval-mode dropout = identity)
    ref = jnp.take(embed_table, token_ids, axis=0) + pe_table[:S][None]
    assert out.shape == (B, S, D) and out.dtype == jnp.float32
    assert jnp.allclose(out, ref, atol=1e-5, rtol=1e-5)

    print("KERNEL_OK")
</pallas_src>

<mosaic_0001>
module attributes {stable_mosaic.version = 11 : i64} {
  func.func @embeddings_kernel(%arg0: i32, %arg1: memref<16xi32, #tpu.memory_space<smem>>, %arg2: memref<64x32xf32, #tpu.memory_space<any>>, %arg3: memref<8x32xf32, #tpu.memory_space<vmem>>, %arg4: memref<8x32xf32, #tpu.memory_space<vmem>>, %arg5: memref<8x32xf32, #tpu.memory_space<vmem>>, %arg6: memref<8x!tpu.dma_semaphore, #tpu.memory_space<semaphore_mem>>) attributes {dimension_semantics = [#tpu.dimension_semantics<parallel>], iteration_bounds = array<i64: 2>, scalar_prefetch = 1 : i64, scratch_operands = 2 : i64, tpu.core_type = #tpu.core_type<tc>, window_params = [{}, {transform_indices = @transform_1, window_bounds = array<i64: 8, 32>}, {transform_indices = @transform_2, window_bounds = array<i64: 8, 32>}]} {
    %c8_i32 = arith.constant 8 : i32
    %0 = arith.muli %arg0, %c8_i32 : i32
    %c0_i32 = arith.constant 0 : i32
    %1 = arith.addi %0, %c0_i32 : i32
    %2 = arith.index_cast %1 : i32 to index
    %3 = memref.load %arg1[%2] : memref<16xi32, #tpu.memory_space<smem>>
    %c0_i32_0 = arith.constant 0 : i32
    %c0_i32_1 = arith.constant 0 : i32
    %c0_i32_2 = arith.constant 0 : i32
    %4 = tpu.memref_slice %arg2[%3, %c0_i32_2] : memref<64x32xf32, #tpu.memory_space<any>> -> memref<1x32xf32, #tpu.memory_space<any>>
    %5 = tpu.memref_squeeze %4 : memref<1x32xf32, #tpu.memory_space<any>> -> memref<32xf32, #tpu.memory_space<any>>
    %c0_i32_3 = arith.constant 0 : i32
    %6 = tpu.memref_slice %arg5[%c0_i32_0, %c0_i32_3] : memref<8x32xf32, #tpu.memory_space<vmem>> -> memref<1x32xf32, #tpu.memory_space<vmem>>
    %7 = tpu.memref_squeeze %6 : memref<1x32xf32, #tpu.memory_space<vmem>> -> memref<32xf32, #tpu.memory_space<vmem>>
    %8 = tpu.memref_slice %arg6[%c0_i32_1] : memref<8x!tpu.dma_semaphore, #tpu.memory_space<semaphore_mem>> -> memref<1x!tpu.dma_semaphore, #tpu.memory_space<semaphore_mem>>
    %9 = tpu.memref_squeeze %8 : memref<1x!tpu.dma_semaphore, #tpu.memory_space<semaphore_mem>> -> memref<!tpu.dma_semaphore, #tpu.memory_space<semaphore_mem>>
    tpu.enqueue_dma source(%5 : memref<32xf32, #tpu.memory_space<any>>) target(%7 : memref<32xf32, #tpu.memory_space<vmem>>) target_semaphore(%9 : memref<!tpu.dma_semaphore, #tpu.memory_space<semaphore_mem>>)
    %c1_i32 = arith.constant 1 : i32
    %10 = arith.addi %0, %c1_i32 : i32
    %11 = arith.index_cast %10 : i32 to index
    %12 = memref.load %arg1[%11] : memref<16xi32, #tpu.memory_space<smem>>
    %c1_i32_4 = arith.constant 1 : i32
    %c1_i32_5 = arith.constant 1 : i32
    %c0_i32_6 = arith.constant 0 : i32
    %13 = tpu.memref_slice %arg2[%12, %c0_i32_6] : memref<64x32xf32, #tpu.memory_space<any>> -> memref<1x32xf32, #tpu.memory_space<any>>
    %14 = tpu.memref_squeeze %13 : memref<1x32xf32, #tpu.memory_space<any>> -> memref<32xf32, #tpu.memory_space<any>>
    %c0_i32_7 = arith.constant 0 : i32
    %15 = tpu.memref_slice %arg5[%c1_i32_4, %c0_i32_7] : memref<8x32xf32, #tpu.memory_space<vmem>> -> memref<1x32xf32, #tpu.memory_space<vmem>>
    %16 = tpu.memref_squeeze %15 : memref<1x32xf32, #tpu.memory_space<vmem>> -> memref<32xf32, #tpu.memory_space<vmem>>
    %17 = tpu.memref_slice %arg6[%c1_i32_5] : memref<8x!tpu.dma_semaphore, #tpu.memory_space<semaphore_mem>> -> memref<1x!tpu.dma_semaphore, #tpu.memory_space<semaphore_mem>>
    %18 = tpu.memref_squeeze %17 : memref<1x!tpu.dma_semaphore, #tpu.memory_space<semaphore_mem>> -> memref<!tpu.dma_semaphore, #tpu.memory_space<semaphore_mem>>
    tpu.enqueue_dma source(%14 : memref<32xf32, #tpu.memory_space<any>>) target(%16 : memref<32xf32, #tpu.memory_space<vmem>>) target_semaphore(%18 : memref<!tpu.dma_semaphore, #tpu.memory_space<semaphore_mem>>)
    %c2_i32 = arith.constant 2 : i32
    %19 = arith.addi %0, %c2_i32 : i32
    %20 = arith.index_cast %19 : i32 to index
    %21 = memref.load %arg1[%20] : memref<16xi32, #tpu.memory_space<smem>>
    %c2_i32_8 = arith.constant 2 : i32
    %c2_i32_9 = arith.constant 2 : i32
    %c0_i32_10 = arith.constant 0 : i32
    %22 = tpu.memref_slice %arg2[%21, %c0_i32_10] : memref<64x32xf32, #tpu.memory_space<any>> -> memref<1x32xf32, #tpu.memory_space<any>>
    %23 = tpu.memref_squeeze %22 : memref<1x32xf32, #tpu.memory_space<any>> -> memref<32xf32, #tpu.memory_space<any>>
    %c0_i32_11 = arith.constant 0 : i32
    %24 = tpu.memref_slice %arg5[%c2_i32_8, %c0_i32_11] : memref<8x32xf32, #tpu.memory_space<vmem>> -> memref<1x32xf32, #tpu.memory_space<vmem>>
    %25 = tpu.memref_squeeze %24 : memref<1x32xf32, #tpu.memory_space<vmem>> -> memref<32xf32, #tpu.memory_space<vmem>>
    %26 = tpu.memref_slice %arg6[%c2_i32_9] : memref<8x!tpu.dma_semaphore, #tpu.memory_space<semaphore_mem>> -> memref<1x!tpu.dma_semaphore, #tpu.memory_space<semaphore_mem>>
    %27 = tpu.memref_squeeze %26 : memref<1x!tpu.dma_semaphore, #tpu.memory_space<semaphore_mem>> -> memref<!tpu.dma_semaphore, #tpu.memory_space<semaphore_mem>>
    tpu.enqueue_dma source(%23 : memref<32xf32, #tpu.memory_space<any>>) target(%25 : memref<32xf32, #tpu.memory_space<vmem>>) target_semaphore(%27 : memref<!tpu.dma_semaphore, #tpu.memory_space<semaphore_mem>>)
    %c3_i32 = arith.constant 3 : i32
    %28 = arith.addi %0, %c3_i32 : i32
    %29 = arith.index_cast %28 : i32 to index
    %30 = memref.load %arg1[%29] : memref<16xi32, #tpu.memory_space<smem>>
    %c3_i32_12 = arith.constant 3 : i32
    %c3_i32_13 = arith.constant 3 : i32
    %c0_i32_14 = arith.constant 0 : i32
    %31 = tpu.memref_slice %arg2[%30, %c0_i32_14] : memref<64x32xf32, #tpu.memory_space<any>> -> memref<1x32xf32, #tpu.memory_space<any>>
    %32 = tpu.memref_squeeze %31 : memref<1x32xf32, #tpu.memory_space<any>> -> memref<32xf32, #tpu.memory_space<any>>
    %c0_i32_15 = arith.constant 0 : i32
    %33 = tpu.memref_slice %arg5[%c3_i32_12, %c0_i32_15] : memref<8x32xf32, #tpu.memory_space<vmem>> -> memref<1x32xf32, #tpu.memory_space<vmem>>
    %34 = tpu.memref_squeeze %33 : memref<1x32xf32, #tpu.memory_space<vmem>> -> memref<32xf32, #tpu.memory_space<vmem>>
    %35 = tpu.memref_slice %arg6[%c3_i32_13] : memref<8x!tpu.dma_semaphore, #tpu.memory_space<semaphore_mem>> -> memref<1x!tpu.dma_semaphore, #tpu.memory_space<semaphore_mem>>
    %36 = tpu.memref_squeeze %35 : memref<1x!tpu.dma_semaphore, #tpu.memory_space<semaphore_mem>> -> memref<!tpu.dma_semaphore, #tpu.memory_space<semaphore_mem>>
    tpu.enqueue_dma source(%32 : memref<32xf32, #tpu.memory_space<any>>) target(%34 : memref<32xf32, #tpu.memory_space<vmem>>) target_semaphore(%36 : memref<!tpu.dma_semaphore, #tpu.memory_space<semaphore_mem>>)
    %c4_i32 = arith.constant 4 : i32
    %37 = arith.addi %0, %c4_i32 : i32
    %38 = arith.index_cast %37 : i32 to index
    %39 = memref.load %arg1[%38] : memref<16xi32, #tpu.memory_space<smem>>
    %c4_i32_16 = arith.constant 4 : i32
    %c4_i32_17 = arith.constant 4 : i32
    %c0_i32_18 = arith.constant 0 : i32
    %40 = tpu.memref_slice %arg2[%39, %c0_i32_18] : memref<64x32xf32, #tpu.memory_space<any>> -> memref<1x32xf32, #tpu.memory_space<any>>
    %41 = tpu.memref_squeeze %40 : memref<1x32xf32, #tpu.memory_space<any>> -> memref<32xf32, #tpu.memory_space<any>>
    %c0_i32_19 = arith.constant 0 : i32
    %42 = tpu.memref_slice %arg5[%c4_i32_16, %c0_i32_19] : memref<8x32xf32, #tpu.memory_space<vmem>> -> memref<1x32xf32, #tpu.memory_space<vmem>>
    %43 = tpu.memref_squeeze %42 : memref<1x32xf32, #tpu.memory_space<vmem>> -> memref<32xf32, #tpu.memory_space<vmem>>
    %44 = tpu.memref_slice %arg6[%c4_i32_17] : memref<8x!tpu.dma_semaphore, #tpu.memory_space<semaphore_mem>> -> memref<1x!tpu.dma_semaphore, #tpu.memory_space<semaphore_mem>>
    %45 = tpu.memref_squeeze %44 : memref<1x!tpu.dma_semaphore, #tpu.memory_space<semaphore_mem>> -> memref<!tpu.dma_semaphore, #tpu.memory_space<semaphore_mem>>
    tpu.enqueue_dma source(%41 : memref<32xf32, #tpu.memory_space<any>>) target(%43 : memref<32xf32, #tpu.memory_space<vmem>>) target_semaphore(%45 : memref<!tpu.dma_semaphore, #tpu.memory_space<semaphore_mem>>)
    %c5_i32 = arith.constant 5 : i32
    %46 = arith.addi %0, %c5_i32 : i32
    %47 = arith.index_cast %46 : i32 to index
    %48 = memref.load %arg1[%47] : memref<16xi32, #tpu.memory_space<smem>>
    %c5_i32_20 = arith.constant 5 : i32
    %c5_i32_21 = arith.constant 5 : i32
    %c0_i32_22 = arith.constant 0 : i32
    %49 = tpu.memref_slice %arg2[%48, %c0_i32_22] : memref<64x32xf32, #tpu.memory_space<any>> -> memref<1x32xf32, #tpu.memory_space<any>>
    %50 = tpu.memref_squeeze %49 : memref<1x32xf32, #tpu.memory_space<any>> -> memref<32xf32, #tpu.memory_space<any>>
    %c0_i32_23 = arith.constant 0 : i32
    %51 = tpu.memref_slice %arg5[%c5_i32_20, %c0_i32_23] : memref<8x32xf32, #tpu.memory_space<vmem>> -> memref<1x32xf32, #tpu.memory_space<vmem>>
    %52 = tpu.memref_squeeze %51 : memref<1x32xf32, #tpu.memory_space<vmem>> -> memref<32xf32, #tpu.memory_space<vmem>>
    %53 = tpu.memref_slice %arg6[%c5_i32_21] : memref<8x!tpu.dma_semaphore, #tpu.memory_space<semaphore_mem>> -> memref<1x!tpu.dma_semaphore, #tpu.memory_space<semaphore_mem>>
    %54 = tpu.memref_squeeze %53 : memref<1x!tpu.dma_semaphore, #tpu.memory_space<semaphore_mem>> -> memref<!tpu.dma_semaphore, #tpu.memory_space<semaphore_mem>>
    tpu.enqueue_dma source(%50 : memref<32xf32, #tpu.memory_space<any>>) target(%52 : memref<32xf32, #tpu.memory_space<vmem>>) target_semaphore(%54 : memref<!tpu.dma_semaphore, #tpu.memory_space<semaphore_mem>>)
    %c6_i32 = arith.constant 6 : i32
    %55 = arith.addi %0, %c6_i32 : i32
    %56 = arith.index_cast %55 : i32 to index
    %57 = memref.load %arg1[%56] : memref<16xi32, #tpu.memory_space<smem>>
    %c6_i32_24 = arith.constant 6 : i32
    %c6_i32_25 = arith.constant 6 : i32
    %c0_i32_26 = arith.constant 0 : i32
    %58 = tpu.memref_slice %arg2[%57, %c0_i32_26] : memref<64x32xf32, #tpu.memory_space<any>> -> memref<1x32xf32, #tpu.memory_space<any>>
    %59 = tpu.memref_squeeze %58 : memref<1x32xf32, #tpu.memory_space<any>> -> memref<32xf32, #tpu.memory_space<any>>
    %c0_i32_27 = arith.constant 0 : i32
    %60 = tpu.memref_slice %arg5[%c6_i32_24, %c0_i32_27] : memref<8x32xf32, #tpu.memory_space<vmem>> -> memref<1x32xf32, #tpu.memory_space<vmem>>
    %61 = tpu.memref_squeeze %60 : memref<1x32xf32, #tpu.memory_space<vmem>> -> memref<32xf32, #tpu.memory_space<vmem>>
    %62 = tpu.memref_slice %arg6[%c6_i32_25] : memref<8x!tpu.dma_semaphore, #tpu.memory_space<semaphore_mem>> -> memref<1x!tpu.dma_semaphore, #tpu.memory_space<semaphore_mem>>
    %63 = tpu.memref_squeeze %62 : memref<1x!tpu.dma_semaphore, #tpu.memory_space<semaphore_mem>> -> memref<!tpu.dma_semaphore, #tpu.memory_space<semaphore_mem>>
    tpu.enqueue_dma source(%59 : memref<32xf32, #tpu.memory_space<any>>) target(%61 : memref<32xf32, #tpu.memory_space<vmem>>) target_semaphore(%63 : memref<!tpu.dma_semaphore, #tpu.memory_space<semaphore_mem>>)
    %c7_i32 = arith.constant 7 : i32
    %64 = arith.addi %0, %c7_i32 : i32
    %65 = arith.index_cast %64 : i32 to index
    %66 = memref.load %arg1[%65] : memref<16xi32, #tpu.memory_space<smem>>
    %c7_i32_28 = arith.constant 7 : i32
    %c7_i32_29 = arith.constant 7 : i32
    %c0_i32_30 = arith.constant 0 : i32
    %67 = tpu.memref_slice %arg2[%66, %c0_i32_30] : memref<64x32xf32, #tpu.memory_space<any>> -> memref<1x32xf32, #tpu.memory_space<any>>
    %68 = tpu.memref_squeeze %67 : memref<1x32xf32, #tpu.memory_space<any>> -> memref<32xf32, #tpu.memory_space<any>>
    %c0_i32_31 = arith.constant 0 : i32
    %69 = tpu.memref_slice %arg5[%c7_i32_28, %c0_i32_31] : memref<8x32xf32, #tpu.memory_space<vmem>> -> memref<1x32xf32, #tpu.memory_space<vmem>>
    %70 = tpu.memref_squeeze %69 : memref<1x32xf32, #tpu.memory_space<vmem>> -> memref<32xf32, #tpu.memory_space<vmem>>
    %71 = tpu.memref_slice %arg6[%c7_i32_29] : memref<8x!tpu.dma_semaphore, #tpu.memory_space<semaphore_mem>> -> memref<1x!tpu.dma_semaphore, #tpu.memory_space<semaphore_mem>>
    %72 = tpu.memref_squeeze %71 : memref<1x!tpu.dma_semaphore, #tpu.memory_space<semaphore_mem>> -> memref<!tpu.dma_semaphore, #tpu.memory_space<semaphore_mem>>
    tpu.enqueue_dma source(%68 : memref<32xf32, #tpu.memory_space<any>>) target(%70 : memref<32xf32, #tpu.memory_space<vmem>>) target_semaphore(%72 : memref<!tpu.dma_semaphore, #tpu.memory_space<semaphore_mem>>)
    %c0_i32_32 = arith.constant 0 : i32
    %c0_i32_33 = arith.constant 0 : i32
    %c0_i32_34 = arith.constant 0 : i32
    %c0_i32_35 = arith.constant 0 : i32
    %73 = tpu.memref_slice %arg2[%c0_i32_32, %c0_i32_35] : memref<64x32xf32, #tpu.memory_space<any>> -> memref<1x32xf32, #tpu.memory_space<any>>
    %74 = tpu.memref_squeeze %73 : memref<1x32xf32, #tpu.memory_space<any>> -> memref<32xf32, #tpu.memory_space<any>>
    %c0_i32_36 = arith.constant 0 : i32
    %75 = tpu.memref_slice %arg5[%c0_i32_33, %c0_i32_36] : memref<8x32xf32, #tpu.memory_space<vmem>> -> memref<1x32xf32, #tpu.memory_space<vmem>>
    %76 = tpu.memref_squeeze %75 : memref<1x32xf32, #tpu.memory_space<vmem>> -> memref<32xf32, #tpu.memory_space<vmem>>
    %77 = tpu.memref_slice %arg6[%c0_i32_34] : memref<8x!tpu.dma_semaphore, #tpu.memory_space<semaphore_mem>> -> memref<1x!tpu.dma_semaphore, #tpu.memory_space<semaphore_mem>>
    %78 = tpu.memref_squeeze %77 : memref<1x!tpu.dma_semaphore, #tpu.memory_space<semaphore_mem>> -> memref<!tpu.dma_semaphore, #tpu.memory_space<semaphore_mem>>
    tpu.wait_dma2 semaphore(%78 : memref<!tpu.dma_semaphore, #tpu.memory_space<semaphore_mem>>) src(%74 : memref<32xf32, #tpu.memory_space<any>>) dst(%76 : memref<32xf32, #tpu.memory_space<vmem>>)
    %c0_i32_37 = arith.constant 0 : i32
    %c1_i32_38 = arith.constant 1 : i32
    %c1_i32_39 = arith.constant 1 : i32
    %c0_i32_40 = arith.constant 0 : i32
    %79 = tpu.memref_slice %arg2[%c0_i32_37, %c0_i32_40] : memref<64x32xf32, #tpu.memory_space<any>> -> memref<1x32xf32, #tpu.memory_space<any>>
    %80 = tpu.memref_squeeze %79 : memref<1x32xf32, #tpu.memory_space<any>> -> memref<32xf32, #tpu.memory_space<any>>
    %c0_i32_41 = arith.constant 0 : i32
    %81 = tpu.memref_slice %arg5[%c1_i32_38, %c0_i32_41] : memref<8x32xf32, #tpu.memory_space<vmem>> -> memref<1x32xf32, #tpu.memory_space<vmem>>
    %82 = tpu.memref_squeeze %81 : memref<1x32xf32, #tpu.memory_space<vmem>> -> memref<32xf32, #tpu.memory_space<vmem>>
    %83 = tpu.memref_slice %arg6[%c1_i32_39] : memref<8x!tpu.dma_semaphore, #tpu.memory_space<semaphore_mem>> -> memref<1x!tpu.dma_semaphore, #tpu.memory_space<semaphore_mem>>
    %84 = tpu.memref_squeeze %83 : memref<1x!tpu.dma_semaphore, #tpu.memory_space<semaphore_mem>> -> memref<!tpu.dma_semaphore, #tpu.memory_space<semaphore_mem>>
    tpu.wait_dma2 semaphore(%84 : memref<!tpu.dma_semaphore, #tpu.memory_space<semaphore_mem>>) src(%80 : memref<32xf32, #tpu.memory_space<any>>) dst(%82 : memref<32xf32, #tpu.memory_space<vmem>>)
    %c0_i32_42 = arith.constant 0 : i32
    %c2_i32_43 = arith.constant 2 : i32
    %c2_i32_44 = arith.constant 2 : i32
    %c0_i32_45 = arith.constant 0 : i32
    %85 = tpu.memref_slice %arg2[%c0_i32_42, %c0_i32_45] : memref<64x32xf32, #tpu.memory_space<any>> -> memref<1x32xf32, #tpu.memory_space<any>>
    %86 = tpu.memref_squeeze %85 : memref<1x32xf32, #tpu.memory_space<any>> -> memref<32xf32, #tpu.memory_space<any>>
    %c0_i32_46 = arith.constant 0 : i32
    %87 = tpu.memref_slice %arg5[%c2_i32_43, %c0_i32_46] : memref<8x32xf32, #tpu.memory_space<vmem>> -> memref<1x32xf32, #tpu.memory_space<vmem>>
    %88 = tpu.memref_squeeze %87 : memref<1x32xf32, #tpu.memory_space<vmem>> -> memref<32xf32, #tpu.memory_space<vmem>>
    %89 = tpu.memref_slice %arg6[%c2_i32_44] : memref<8x!tpu.dma_semaphore, #tpu.memory_space<semaphore_mem>> -> memref<1x!tpu.dma_semaphore, #tpu.memory_space<semaphore_mem>>
    %90 = tpu.memref_squeeze %89 : memref<1x!tpu.dma_semaphore, #tpu.memory_space<semaphore_mem>> -> memref<!tpu.dma_semaphore, #tpu.memory_space<semaphore_mem>>
    tpu.wait_dma2 semaphore(%90 : memref<!tpu.dma_semaphore, #tpu.memory_space<semaphore_mem>>) src(%86 : memref<32xf32, #tpu.memory_space<any>>) dst(%88 : memref<32xf32, #tpu.memory_space<vmem>>)
    %c0_i32_47 = arith.constant 0 : i32
    %c3_i32_48 = arith.constant 3 : i32
    %c3_i32_49 = arith.constant 3 : i32
    %c0_i32_50 = arith.constant 0 : i32
    %91 = tpu.memref_slice %arg2[%c0_i32_47, %c0_i32_50] : memref<64x32xf32, #tpu.memory_space<any>> -> memref<1x32xf32, #tpu.memory_space<any>>
    %92 = tpu.memref_squeeze %91 : memref<1x32xf32, #tpu.memory_space<any>> -> memref<32xf32, #tpu.memory_space<any>>
    %c0_i32_51 = arith.constant 0 : i32
    %93 = tpu.memref_slice %arg5[%c3_i32_48, %c0_i32_51] : memref<8x32xf32, #tpu.memory_space<vmem>> -> memref<1x32xf32, #tpu.memory_space<vmem>>
    %94 = tpu.memref_squeeze %93 : memref<1x32xf32, #tpu.memory_space<vmem>> -> memref<32xf32, #tpu.memory_space<vmem>>
    %95 = tpu.memref_slice %arg6[%c3_i32_49] : memref<8x!tpu.dma_semaphore, #tpu.memory_space<semaphore_mem>> -> memref<1x!tpu.dma_semaphore, #tpu.memory_space<semaphore_mem>>
    %96 = tpu.memref_squeeze %95 : memref<1x!tpu.dma_semaphore, #tpu.memory_space<semaphore_mem>> -> memref<!tpu.dma_semaphore, #tpu.memory_space<semaphore_mem>>
    tpu.wait_dma2 semaphore(%96 : memref<!tpu.dma_semaphore, #tpu.memory_space<semaphore_mem>>) src(%92 : memref<32xf32, #tpu.memory_space<any>>) dst(%94 : memref<32xf32, #tpu.memory_space<vmem>>)
    %c0_i32_52 = arith.constant 0 : i32
    %c4_i32_53 = arith.constant 4 : i32
    %c4_i32_54 = arith.constant 4 : i32
    %c0_i32_55 = arith.constant 0 : i32
    %97 = tpu.memref_slice %arg2[%c0_i32_52, %c0_i32_55] : memref<64x32xf32, #tpu.memory_space<any>> -> memref<1x32xf32, #tpu.memory_space<any>>
    %98 = tpu.memref_squeeze %97 : memref<1x32xf32, #tpu.memory_space<any>> -> memref<32xf32, #tpu.memory_space<any>>
    %c0_i32_56 = arith.constant 0 : i32
    %99 = tpu.memref_slice %arg5[%c4_i32_53, %c0_i32_56] : memref<8x32xf32, #tpu.memory_space<vmem>> -> memref<1x32xf32, #tpu.memory_space<vmem>>
    %100 = tpu.memref_squeeze %99 : memref<1x32xf32, #tpu.memory_space<vmem>> -> memref<32xf32, #tpu.memory_space<vmem>>
    %101 = tpu.memref_slice %arg6[%c4_i32_54] : memref<8x!tpu.dma_semaphore, #tpu.memory_space<semaphore_mem>> -> memref<1x!tpu.dma_semaphore, #tpu.memory_space<semaphore_mem>>
    %102 = tpu.memref_squeeze %101 : memref<1x!tpu.dma_semaphore, #tpu.memory_space<semaphore_mem>> -> memref<!tpu.dma_semaphore, #tpu.memory_space<semaphore_mem>>
    tpu.wait_dma2 semaphore(%102 : memref<!tpu.dma_semaphore, #tpu.memory_space<semaphore_mem>>) src(%98 : memref<32xf32, #tpu.memory_space<any>>) dst(%100 : memref<32xf32, #tpu.memory_space<vmem>>)
    %c0_i32_57 = arith.constant 0 : i32
    %c5_i32_58 = arith.constant 5 : i32
    %c5_i32_59 = arith.constant 5 : i32
    %c0_i32_60 = arith.constant 0 : i32
    %103 = tpu.memref_slice %arg2[%c0_i32_57, %c0_i32_60] : memref<64x32xf32, #tpu.memory_space<any>> -> memref<1x32xf32, #tpu.memory_space<any>>
    %104 = tpu.memref_squeeze %103 : memref<1x32xf32, #tpu.memory_space<any>> -> memref<32xf32, #tpu.memory_space<any>>
    %c0_i32_61 = arith.constant 0 : i32
    %105 = tpu.memref_slice %arg5[%c5_i32_58, %c0_i32_61] : memref<8x32xf32, #tpu.memory_space<vmem>> -> memref<1x32xf32, #tpu.memory_space<vmem>>
    %106 = tpu.memref_squeeze %105 : memref<1x32xf32, #tpu.memory_space<vmem>> -> memref<32xf32, #tpu.memory_space<vmem>>
    %107 = tpu.memref_slice %arg6[%c5_i32_59] : memref<8x!tpu.dma_semaphore, #tpu.memory_space<semaphore_mem>> -> memref<1x!tpu.dma_semaphore, #tpu.memory_space<semaphore_mem>>
    %108 = tpu.memref_squeeze %107 : memref<1x!tpu.dma_semaphore, #tpu.memory_space<semaphore_mem>> -> memref<!tpu.dma_semaphore, #tpu.memory_space<semaphore_mem>>
    tpu.wait_dma2 semaphore(%108 : memref<!tpu.dma_semaphore, #tpu.memory_space<semaphore_mem>>) src(%104 : memref<32xf32, #tpu.memory_space<any>>) dst(%106 : memref<32xf32, #tpu.memory_space<vmem>>)
    %c0_i32_62 = arith.constant 0 : i32
    %c6_i32_63 = arith.constant 6 : i32
    %c6_i32_64 = arith.constant 6 : i32
    %c0_i32_65 = arith.constant 0 : i32
    %109 = tpu.memref_slice %arg2[%c0_i32_62, %c0_i32_65] : memref<64x32xf32, #tpu.memory_space<any>> -> memref<1x32xf32, #tpu.memory_space<any>>
    %110 = tpu.memref_squeeze %109 : memref<1x32xf32, #tpu.memory_space<any>> -> memref<32xf32, #tpu.memory_space<any>>
    %c0_i32_66 = arith.constant 0 : i32
    %111 = tpu.memref_slice %arg5[%c6_i32_63, %c0_i32_66] : memref<8x32xf32, #tpu.memory_space<vmem>> -> memref<1x32xf32, #tpu.memory_space<vmem>>
    %112 = tpu.memref_squeeze %111 : memref<1x32xf32, #tpu.memory_space<vmem>> -> memref<32xf32, #tpu.memory_space<vmem>>
    %113 = tpu.memref_slice %arg6[%c6_i32_64] : memref<8x!tpu.dma_semaphore, #tpu.memory_space<semaphore_mem>> -> memref<1x!tpu.dma_semaphore, #tpu.memory_space<semaphore_mem>>
    %114 = tpu.memref_squeeze %113 : memref<1x!tpu.dma_semaphore, #tpu.memory_space<semaphore_mem>> -> memref<!tpu.dma_semaphore, #tpu.memory_space<semaphore_mem>>
    tpu.wait_dma2 semaphore(%114 : memref<!tpu.dma_semaphore, #tpu.memory_space<semaphore_mem>>) src(%110 : memref<32xf32, #tpu.memory_space<any>>) dst(%112 : memref<32xf32, #tpu.memory_space<vmem>>)
    %c0_i32_67 = arith.constant 0 : i32
    %c7_i32_68 = arith.constant 7 : i32
    %c7_i32_69 = arith.constant 7 : i32
    %c0_i32_70 = arith.constant 0 : i32
    %115 = tpu.memref_slice %arg2[%c0_i32_67, %c0_i32_70] : memref<64x32xf32, #tpu.memory_space<any>> -> memref<1x32xf32, #tpu.memory_space<any>>
    %116 = tpu.memref_squeeze %115 : memref<1x32xf32, #tpu.memory_space<any>> -> memref<32xf32, #tpu.memory_space<any>>
    %c0_i32_71 = arith.constant 0 : i32
    %117 = tpu.memref_slice %arg5[%c7_i32_68, %c0_i32_71] : memref<8x32xf32, #tpu.memory_space<vmem>> -> memref<1x32xf32, #tpu.memory_space<vmem>>
    %118 = tpu.memref_squeeze %117 : memref<1x32xf32, #tpu.memory_space<vmem>> -> memref<32xf32, #tpu.memory_space<vmem>>
    %119 = tpu.memref_slice %arg6[%c7_i32_69] : memref<8x!tpu.dma_semaphore, #tpu.memory_space<semaphore_mem>> -> memref<1x!tpu.dma_semaphore, #tpu.memory_space<semaphore_mem>>
    %120 = tpu.memref_squeeze %119 : memref<1x!tpu.dma_semaphore, #tpu.memory_space<semaphore_mem>> -> memref<!tpu.dma_semaphore, #tpu.memory_space<semaphore_mem>>
    tpu.wait_dma2 semaphore(%120 : memref<!tpu.dma_semaphore, #tpu.memory_space<semaphore_mem>>) src(%116 : memref<32xf32, #tpu.memory_space<any>>) dst(%118 : memref<32xf32, #tpu.memory_space<vmem>>)
    %c0 = arith.constant 0 : index
    %c0_72 = arith.constant 0 : index
    %121 = vector.load %arg5[%c0, %c0_72] : memref<8x32xf32, #tpu.memory_space<vmem>>, vector<8x32xf32>
    %c0_73 = arith.constant 0 : index
    %c0_74 = arith.constant 0 : index
    %122 = vector.load %arg3[%c0_73, %c0_74] : memref<8x32xf32, #tpu.memory_space<vmem>>, vector<8x32xf32>
    %123 = arith.addf %121, %122 : vector<8x32xf32>
    %c0_75 = arith.constant 0 : index
    %c0_76 = arith.constant 0 : index
    %124 = vector.load %arg4[%c0_75, %c0_76] : memref<8x32xf32, #tpu.memory_space<vmem>>, vector<8x32xf32>
    tpu.vector_store %arg4[%c0_75, %c0_76], %123 {strides = array<i32>} : memref<8x32xf32, #tpu.memory_space<vmem>>, vector<8x32xf32>,
    return
  }
  func.func @transform_1(%arg0: i32, %arg1: memref<16xi32, #tpu.memory_space<smem>>) -> (i32, i32) {
    %c0_i32 = arith.constant 0 : i32
    %c0_i32_0 = arith.constant 0 : i32
    return %arg0, %c0_i32 : i32, i32
  }
  func.func @transform_2(%arg0: i32, %arg1: memref<16xi32, #tpu.memory_space<smem>>) -> (i32, i32) {
    %c0_i32 = arith.constant 0 : i32
    %c0_i32_0 = arith.constant 0 : i32
    return %arg0, %c0_i32 : i32, i32
  }
}

</mosaic_0001>

<llo_original>
// kernel: tpu_custom_call.1
$region0: #{tpu_custom_call.1}
  #allocation0 [shape = 'u32[]', space=smem, size = 0x4, offset = 0x4, fixed_abs, tag = 'smem constant byte address 0x4 - core index']
  #allocation1 [shape = 'u32[144,128]{1,0:T(1,128)}', space=vmem, size = 0x12000, scoped, tag = 'internal scratch']
  #allocation2 [shape = 'f32[8,32]{1,0:T(8,128)}', space=vmem, size = 0x1000, scoped, tag = 'scratch operand']
  #allocation3 [shape = 's32[8]{0}', space=sflag, size = 0x20, scoped, tag = 'scratch operand']
  #allocation4 [shape = 's32[1]{0}', space=sflag, size = 0x4, scoped, tag = 'scoped memory for tpu_custom_call.1']
  #allocation5 [shape = 'u8[512]{0}', space=smem, size = 0x200, scoped, tag = 'prefetched SMEM operand 0']
  #allocation8 [shape = 's32[]', space=sflag, size = 0x4, offset = 0, fixed_abs, tag = 'sflag constant byte address 0x0 - dummy sync flag']
  #allocation9 [shape = 's32[]', space=sflag, size = 0x4, offset = 0, fixed_abs, tag = 'sflag constant byte address 0x0 - dummy sync flag']
  #allocation10 [shape = 's32[]', space=sflag, size = 0x4, offset = 0, fixed_abs, tag = 'sflag constant byte address 0x0 - dummy sync flag']
  #allocation11 [shape = 's32[]', space=sflag, size = 0x4, offset = 0, fixed_abs, tag = 'sflag constant byte address 0x0 - dummy sync flag']
  #allocation12 [shape = 's32[]', space=sflag, size = 0x4, offset = 0, fixed_abs, tag = 'sflag constant byte address 0x0 - dummy sync flag']
  #allocation13 [shape = 's32[]', space=sflag, size = 0x4, offset = 0, fixed_abs, tag = 'sflag constant byte address 0x0 - dummy sync flag']
  #allocation14 [shape = 's32[]', space=sflag, size = 0x4, offset = 0, fixed_abs, tag = 'sflag constant byte address 0x0 - dummy sync flag']
  #allocation15 [shape = 's32[]', space=sflag, size = 0x4, offset = 0, fixed_abs, tag = 'sflag constant byte address 0x0 - dummy sync flag']
  %s0 = inlined_call_operand.vmem [shape: s32[16], index: 0, kind: input, shape index: {}]
  %s1 = inlined_call_operand.vmem [shape: f32[64,32], index: 1, kind: input, shape index: {}]
  %s2 = inlined_call_operand.vmem [shape: f32[16,32], index: 2, kind: input, shape index: {}]
  %s3 = inlined_call_operand.hbm [shape: f32[16,32], index: 3, kind: output, shape index: {}]
  %s4 = sld [smem:[#allocation0]]
  $region277: #{tpu_custom_call.1} parent=0
    _
  %s6 = ssub.s32 1, %s4
  %s7 = scalar_select 0, %s6, %s4
  %s8 = sshll.u32 %s0, 4
  %s9 = int_to_ptr.vmem [resolvable:$true] %s8
  %11 = dma.vmem_to_smem %s9, 16, [#allocation5], [#allocation4]
  %12 = dma.done [#allocation4], 16
  %13 = sfence
  $region1: #{tpu_custom_call.1} parent=0
    #allocation6 [shape = 'u8[8192]{0}', space=vmem, size = 0x2000, scoped, tag = 'output window, operand 0']
    #allocation7 [shape = 's32[2]{0}', space=sflag, size = 0x8, scoped, tag = 'scoped memory for tpu_custom_call.1']
    %14 = vsyncpa [#allocation7], 0
    %s15 = scalar_lea.sflag [#allocation7], 1
    %16 = vsyncpa %s15, 0
    loop: start=0, step=1, limit=4
    $region2: #{tpu_custom_call.1} parent=1 // loop_pre_header
      _
    $region3: #{tpu_custom_call.1} parent=1 // loop_header
      %s18 = sphi 0, %s22
      %p19 = scmp.ge.s32.totalorder %s18, 4
      %s28 = sphi 0, %s30
      %s31 = sphi 0, %s28
      %s32 = sphi 0, %s31
      %s48 = sphi 0, %s32
      %s54 = sphi 0, %s56
      %s57 = sphi 0, %s54
      %s58 = sphi 0, %s57
      %s74 = sphi 0, %s58
    $region4: #{tpu_custom_call.1} parent=1 // loop_header_branch
      %21 = sbr.rel (%p19) target = $region8
    $region5: #{tpu_custom_call.1} parent=1 // loop_body
      %s23 = ssub.s32 %s18, 1
      %s24 = ssub.s32 %s18, 2
      %s25 = sadd.s32 %s18, 1
      %s26 = ssub.s32 %s18, %s25
      %p27 = scmp.eq.s32.totalorder %s26, 0
      %s29 = sadd.s32 %s28, 1
      %s30 = scalar_select %p27, %s28, %s29
      %p33 = pneg %p27
      %p34 = scmp.eq.s32.totalorder %s18, 1
      %p35 = por %p33, %p34
      %p36 = scmp.ne.s32.totalorder %s28, %s31
      %p37 = scmp.eq.s32.totalorder %s18, 0
      %p38 = por %p36, %p37
      %p39 = scmp.ne.s32.totalorder %s28, %s31
      %p40 = scmp.eq.s32.totalorder %s23, 1
      %p41 = por %p39, %p40
      %p42 = scmp.ne.s32.totalorder %s31, %s32
      %p43 = scmp.eq.s32.totalorder %s23, 0
      %p44 = por %p42, %p43
      %p45 = scmp.ne.s32.totalorder %s31, %s32
      %p46 = scmp.eq.s32.totalorder %s24, 1
      %p47 = por %p45, %p46
      %p49 = scmp.ne.s32.totalorder %s32, %s48
      %p50 = scmp.eq.s32.totalorder %s24, 0
      %p51 = por %p49, %p50
      %s52 = ssub.s32 %s18, %s25
      %p53 = scmp.eq.s32.totalorder %s52, 0
      %s55 = sadd.s32 %s54, 1
      %s56 = scalar_select %p53, %s54, %s55
      %p59 = pneg %p53
      %p60 = scmp.eq.s32.totalorder %s18, 1
      %p61 = por %p59, %p60
      %p62 = scmp.ne.s32.totalorder %s54, %s57
      %p63 = scmp.eq.s32.totalorder %s18, 0
      %p64 = por %p62, %p63
      %p65 = scmp.ne.s32.totalorder %s54, %s57
      %p66 = scmp.eq.s32.totalorder %s23, 1
      %p67 = por %p65, %p66
      %p68 = scmp.ne.s32.totalorder %s57, %s58
      %p69 = scmp.eq.s32.totalorder %s23, 0
      %p70 = por %p68, %p69
      %p71 = scmp.ne.s32.totalorder %s57, %s58
      %p72 = scmp.eq.s32.totalorder %s24, 1
      %p73 = por %p71, %p72
      %p75 = scmp.ne.s32.totalorder %s58, %s74
      %p76 = scmp.eq.s32.totalorder %s24, 0
      %p77 = por %p75, %p76
      %p78 = scmp.le.s32.totalorder 1, %s18
      %p79 = scmp.lt.s32.totalorder %s18, 3
      %p80 = pnand %p78, %p79
      %p81 = pneg %p80
      // Predicated region
      $region9: #{tpu_custom_call.1} parent=5 // pred_check
        _
      $region10: #{tpu_custom_call.1} parent=5 // pred_check_branch
        %83 = sbr.rel (%p80) target = $region12
      $region11: #{tpu_custom_call.1} parent=5 // pred_region
        %s84 = ssub.s32 %s18, 1
      $region12: #{tpu_custom_call.1} parent=5 // pred_fallthru
        _
      %p85 = scmp.lt.s32.totalorder %s18, 2
      // Predicated region
      $region13: #{tpu_custom_call.1} parent=5 // pred_check
        %p86 = pneg %p85
      $region14: #{tpu_custom_call.1} parent=5 // pred_check_branch
        %88 = sbr.rel (%p86) target = $region16
      $region15: #{tpu_custom_call.1} parent=5 // pred_region
        // Predicated region
        $region17: #{tpu_custom_call.1} parent=15 // pred_check
          %p89 = pneg %p38
        $region18: #{tpu_custom_call.1} parent=15 // pred_check_branch
          %91 = sbr.rel (%p89) target = $region20
        $region19: #{tpu_custom_call.1} parent=15 // pred_region
          %p92 = scmp.lt.s32.totalorder %s18, 1
          %s93 = scalar_select %p92, %s18, 1
          %s94 = smul.addr %s93, 8
          %s95 = scalar_lea.vmem %s2, %s94
        $region20: #{tpu_custom_call.1} parent=15 // pred_fallthru
          _
      $region16: #{tpu_custom_call.1} parent=5 // pred_fallthru
        _
      %p96 = scmp.le.s32.totalorder 1, %s18
      %p97 = scmp.lt.s32.totalorder %s18, 3
      %p98 = pnand %p96, %p97
      %p99 = pneg %p98
      // Predicated region
      $region21: #{tpu_custom_call.1} parent=5 // pred_check
        _
      $region22: #{tpu_custom_call.1} parent=5 // pred_check_branch
        %101 = sbr.rel (%p98) target = $region24
      $region23: #{tpu_custom_call.1} parent=5 // pred_region
        %s102 = ssub.s32 %s18, 1
        %p103 = scmp.lt.s32.totalorder %s23, 1
        %s104 = scalar_select %p103, %s23, 1
        %s105 = smul.addr %s104, 8
        %s106 = scalar_lea.vmem %s2, %s105
        %p107 = pneg %p44
        %p108 = pneg %p41
        %p109 = pneg %p70
        %p110 = pneg %p67
        %s111 = sand.u32 %s57, 1
        %s112 = scalar_lea.sflag [#allocation7], %s111
        %s113 = sand.u32 %s57, 1
        %s114 = smul.addr %s113, 8
        %s115 = scalar_lea.vmem [#allocation6], %s114
        %p116 = scmp.lt.s32.totalorder %s23, 1
        %s117 = scalar_select %p116, %s23, 1
        %s118 = smul.addr %s117, 8
        %s119 = scalar_lea.vmem %s2, %s118
        %s120 = smul.u32 %s23, 8
        %s121 = sld [smem:[#allocation5 + %s120]]
        %s122 = scalar_lea.vmem %s1, %s121
        %p124 = scmp.lt.u32.totalorder 1, 8
        %p125 = pneg %p124
        // Predicated region
        $region25: #{tpu_custom_call.1} parent=23 // pred_check
          _
        $region26: #{tpu_custom_call.1} parent=23 // pred_check_branch
          %127 = sbr.rel (%p124) target = $region28
        $region27: #{tpu_custom_call.1} parent=23 // pred_region
          %s142 = sand.u32 1, 7
          %p143 = scmp.eq.s32.totalorder %s142, 0
          %p144 = pneg %p143
          // Predicated region
          $region40: #{tpu_custom_call.1} parent=27 // pred_check
            _
          $region41: #{tpu_custom_call.1} parent=27 // pred_check_branch
            %146 = sbr.rel (%p143) target = $region43
          $region42: #{tpu_custom_call.1} parent=27 // pred_region
            %s147 = sand.u32 1, 7
            %s148 = ssub.s32 1, %s147
            %s149 = scalar_lea.vmem %s122, %s148
            %s150 = ssub.s32 1, %s147
            %s151 = scalar_lea.vmem [#allocation2], %s150
            %s152 = sshllo.u32 0, %s147
            loop: start=0, step=1, limit=1
            $region44: #{tpu_custom_call.1} parent=42 // loop_pre_header
              _
            $region45: #{tpu_custom_call.1} parent=42 // loop_header
              %s154 = sphi 0, %s158
              %p155 = scmp.ge.s32.totalorder %s154, 1
              %s159 = sphi %s149, %s149
              %s160 = sphi %s151, %s151
            $region46: #{tpu_custom_call.1} parent=42 // loop_header_branch
              %157 = sbr.rel (%p155) target = $region50
            $region47: #{tpu_custom_call.1} parent=42 // loop_body
              %v161 = vld [vmem:[%s159] sm:%s152]
              %162 = vst [vmem:[%s160] sm:%s152] %v161
            $region48: #{tpu_custom_call.1} parent=42 // loop_footer
              %s158 = sadd.s32 1, %s154
            $region49: #{tpu_custom_call.1} parent=42 // loop_footer_branch
              %153 = sbr.rel target = $region45
            $region50: #{tpu_custom_call.1} parent=42 // loop_exit
              _
          $region43: #{tpu_custom_call.1} parent=27 // pred_fallthru
            _
        $region28: #{tpu_custom_call.1} parent=23 // pred_fallthru
          _
        // Predicated region
        $region29: #{tpu_custom_call.1} parent=23 // pred_check
          %p128 = pneg %p124
        $region30: #{tpu_custom_call.1} parent=23 // pred_check_branch
          %130 = sbr.rel (%p128) target = $region32
        $region31: #{tpu_custom_call.1} parent=23 // pred_region
          %s131 = sshllo.u32 0, 1
          loop: start=0, step=1, limit=1
          $region33: #{tpu_custom_call.1} parent=31 // loop_pre_header
            _
          $region34: #{tpu_custom_call.1} parent=31 // loop_header
            %s133 = sphi 0, %s137
            %p134 = scmp.ge.s32.totalorder %s133, 1
            %s138 = sphi %s122, %s122
            %s139 = sphi [#allocation2], [#allocation2]
          $region35: #{tpu_custom_call.1} parent=31 // loop_header_branch
            %136 = sbr.rel (%p134) target = $region39
          $region36: #{tpu_custom_call.1} parent=31 // loop_body
            %v140 = vld [vmem:[%s138] sm:%s131]
            %141 = vst [vmem:[%s139] sm:%s131] %v140
          $region37: #{tpu_custom_call.1} parent=31 // loop_footer
            %s137 = sadd.s32 1, %s133
          $region38: #{tpu_custom_call.1} parent=31 // loop_footer_branch
            %132 = sbr.rel target = $region34
          $region39: #{tpu_custom_call.1} parent=31 // loop_exit
            _
        $region32: #{tpu_custom_call.1} parent=23 // pred_fallthru
          _
        // Predicated region
        $region51: #{tpu_custom_call.1} parent=23 // pred_check
          _
        $region52: #{tpu_custom_call.1} parent=23 // pred_check_branch
          %165 = sbr.rel (0) target = $region54
        $region53: #{tpu_custom_call.1} parent=23 // pred_region
          %166 = vsyncadd [#allocation3], 16
        $region54: #{tpu_custom_call.1} parent=23 // pred_fallthru
          _
        %s167 = sadd.s32 %s120, 1
        %s168 = sld [smem:[#allocation5 + %s167]]
        %s169 = scalar_lea.vmem %s1, %s168
        %s170 = scalar_lea.vmem [#allocation2], 1
        %s171 = scalar_lea.sflag [#allocation3], 1
        %p173 = scmp.lt.u32.totalorder 1, 8
        %p174 = pneg %p173
        // Predicated region
        $region55: #{tpu_custom_call.1} parent=23 // pred_check
          _
        $region56: #{tpu_custom_call.1} parent=23 // pred_check_branch
          %176 = sbr.rel (%p173) target = $region58
        $region57: #{tpu_custom_call.1} parent=23 // pred_region
          %s191 = sand.u32 1, 7
          %p192 = scmp.eq.s32.totalorder %s191, 0
          %p193 = pneg %p192
          // Predicated region
          $region70: #{tpu_custom_call.1} parent=57 // pred_check
            _
          $region71: #{tpu_custom_call.1} parent=57 // pred_check_branch
            %195 = sbr.rel (%p192) target = $region73
          $region72: #{tpu_custom_call.1} parent=57 // pred_region
            %s196 = sand.u32 1, 7
            %s197 = ssub.s32 1, %s196
            %s198 = scalar_lea.vmem %s169, %s197
            %s199 = ssub.s32 1, %s196
            %s200 = scalar_lea.vmem %s170, %s199 [#allocation2]
            %s201 = sshllo.u32 0, %s196
            loop: start=0, step=1, limit=1
            $region74: #{tpu_custom_call.1} parent=72 // loop_pre_header
              _
            $region75: #{tpu_custom_call.1} parent=72 // loop_header
              %s203 = sphi 0, %s207
              %p204 = scmp.ge.s32.totalorder %s203, 1
              %s208 = sphi %s198, %s198
              %s209 = sphi %s200, %s200
            $region76: #{tpu_custom_call.1} parent=72 // loop_header_branch
              %206 = sbr.rel (%p204) target = $region80
            $region77: #{tpu_custom_call.1} parent=72 // loop_body
              %v210 = vld [vmem:[%s208] sm:%s201]
              %211 = vst [vmem:[%s209] sm:%s201] %v210
            $region78: #{tpu_custom_call.1} parent=72 // loop_footer
              %s207 = sadd.s32 1, %s203
            $region79: #{tpu_custom_call.1} parent=72 // loop_footer_branch
              %202 = sbr.rel target = $region75
            $region80: #{tpu_custom_call.1} parent=72 // loop_exit
              _
          $region73: #{tpu_custom_call.1} parent=57 // pred_fallthru
            _
        $region58: #{tpu_custom_call.1} parent=23 // pred_fallthru
          _
        // Predicated region
        $region59: #{tpu_custom_call.1} parent=23 // pred_check
          %p177 = pneg %p173
        $region60: #{tpu_custom_call.1} parent=23 // pred_check_branch
          %179 = sbr.rel (%p177) target = $region62
        $region61: #{tpu_custom_call.1} parent=23 // pred_region
          %s180 = sshllo.u32 0, 1
          loop: start=0, step=1, limit=1
          $region63: #{tpu_custom_call.1} parent=61 // loop_pre_header
            _
          $region64: #{tpu_custom_call.1} parent=61 // loop_header
            %s182 = sphi 0, %s186
            %p183 = scmp.ge.s32.totalorder %s182, 1
            %s187 = sphi %s169, %s169
            %s188 = sphi %s170, %s170
          $region65: #{tpu_custom_call.1} parent=61 // loop_header_branch
            %185 = sbr.rel (%p183) target = $region69
          $region66: #{tpu_custom_call.1} parent=61 // loop_body
            %v189 = vld [vmem:[%s187] sm:%s180]
            %190 = vst [vmem:[%s188] sm:%s180] %v189
          $region67: #{tpu_custom_call.1} parent=61 // loop_footer
            %s186 = sadd.s32 1, %s182
          $region68: #{tpu_custom_call.1} parent=61 // loop_footer_branch
            %181 = sbr.rel target = $region64
          $region69: #{tpu_custom_call.1} parent=61 // loop_exit
            _
        $region62: #{tpu_custom_call.1} parent=23 // pred_fallthru
          _
        // Predicated region
        $region81: #{tpu_custom_call.1} parent=23 // pred_check
          _
        $region82: #{tpu_custom_call.1} parent=23 // pred_check_branch
          %214 = sbr.rel (0) target = $region84
        $region83: #{tpu_custom_call.1} parent=23 // pred_region
          %215 = vsyncadd %s171, 16
        $region84: #{tpu_custom_call.1} parent=23 // pred_fallthru
          _
        %s216 = sadd.s32 %s120, 2
        %s217 = sld [smem:[#allocation5 + %s216]]
        %s218 = scalar_lea.vmem %s1, %s217
        %s219 = scalar_lea.vmem [#allocation2], 2
        %s220 = scalar_lea.sflag [#allocation3], 2
        %p222 = scmp.lt.u32.totalorder 1, 8
        %p223 = pneg %p222
        // Predicated region
        $region85: #{tpu_custom_call.1} parent=23 // pred_check
          _
        $region86: #{tpu_custom_call.1} parent=23 // pred_check_branch
          %225 = sbr.rel (%p222) target = $region88
        $region87: #{tpu_custom_call.1} parent=23 // pred_region
          %s240 = sand.u32 1, 7
          %p241 = scmp.eq.s32.totalorder %s240, 0
          %p242 = pneg %p241
          // Predicated region
          $region100: #{tpu_custom_call.1} parent=87 // pred_check
            _
          $region101: #{tpu_custom_call.1} parent=87 // pred_check_branch
            %244 = sbr.rel (%p241) target = $region103
          $region102: #{tpu_custom_call.1} parent=87 // pred_region
            %s245 = sand.u32 1, 7
            %s246 = ssub.s32 1, %s245
            %s247 = scalar_lea.vmem %s218, %s246
            %s248 = ssub.s32 1, %s245
            %s249 = scalar_lea.vmem %s219, %s248 [#allocation2]
            %s250 = sshllo.u32 0, %s245
            loop: start=0, step=1, limit=1
            $region104: #{tpu_custom_call.1} parent=102 // loop_pre_header
              _
            $region105: #{tpu_custom_call.1} parent=102 // loop_header
              %s252 = sphi 0, %s256
              %p253 = scmp.ge.s32.totalorder %s252, 1
              %s257 = sphi %s247, %s247
              %s258 = sphi %s249, %s249
            $region106: #{tpu_custom_call.1} parent=102 // loop_header_branch
              %255 = sbr.rel (%p253) target = $region110
            $region107: #{tpu_custom_call.1} parent=102 // loop_body
              %v259 = vld [vmem:[%s257] sm:%s250]
              %260 = vst [vmem:[%s258] sm:%s250] %v259
            $region108: #{tpu_custom_call.1} parent=102 // loop_footer
              %s256 = sadd.s32 1, %s252
            $region109: #{tpu_custom_call.1} parent=102 // loop_footer_branch
              %251 = sbr.rel target = $region105
            $region110: #{tpu_custom_call.1} parent=102 // loop_exit
              _
          $region103: #{tpu_custom_call.1} parent=87 // pred_fallthru
            _
        $region88: #{tpu_custom_call.1} parent=23 // pred_fallthru
          _
        // Predicated region
        $region89: #{tpu_custom_call.1} parent=23 // pred_check
          %p226 = pneg %p222
        $region90: #{tpu_custom_call.1} parent=23 // pred_check_branch
          %228 = sbr.rel (%p226) target = $region92
        $region91: #{tpu_custom_call.1} parent=23 // pred_region
          %s229 = sshllo.u32 0, 1
          loop: start=0, step=1, limit=1
          $region93: #{tpu_custom_call.1} parent=91 // loop_pre_header
            _
          $region94: #{tpu_custom_call.1} parent=91 // loop_header
            %s231 = sphi 0, %s235
            %p232 = scmp.ge.s32.totalorder %s231, 1
            %s236 = sphi %s218, %s218
            %s237 = sphi %s219, %s219
          $region95: #{tpu_custom_call.1} parent=91 // loop_header_branch
            %234 = sbr.rel (%p232) target = $region99
          $region96: #{tpu_custom_call.1} parent=91 // loop_body
            %v238 = vld [vmem:[%s236] sm:%s229]
            %239 = vst [vmem:[%s237] sm:%s229] %v238
          $region97: #{tpu_custom_call.1} parent=91 // loop_footer
            %s235 = sadd.s32 1, %s231
          $region98: #{tpu_custom_call.1} parent=91 // loop_footer_branch
            %230 = sbr.rel target = $region94
          $region99: #{tpu_custom_call.1} parent=91 // loop_exit
            _
        $region92: #{tpu_custom_call.1} parent=23 // pred_fallthru
          _
        // Predicated region
        $region111: #{tpu_custom_call.1} parent=23 // pred_check
          _
        $region112: #{tpu_custom_call.1} parent=23 // pred_check_branch
          %263 = sbr.rel (0) target = $region114
        $region113: #{tpu_custom_call.1} parent=23 // pred_region
          %264 = vsyncadd %s220, 16
        $region114: #{tpu_custom_call.1} parent=23 // pred_fallthru
          _
        %s265 = sadd.s32 %s120, 3
        %s266 = sld [smem:[#allocation5 + %s265]]
        %s267 = scalar_lea.vmem %s1, %s266
        %s268 = scalar_lea.vmem [#allocation2], 3
        %s269 = scalar_lea.sflag [#allocation3], 3
        %p271 = scmp.lt.u32.totalorder 1, 8
        %p272 = pneg %p271
        // Predicated region
        $region115: #{tpu_custom_call.1} parent=23 // pred_check
          _
        $region116: #{tpu_custom_call.1} parent=23 // pred_check_branch
          %274 = sbr.rel (%p271) target = $region118
        $region117: #{tpu_custom_call.1} parent=23 // pred_region
          %s289 = sand.u32 1, 7
          %p290 = scmp.eq.s32.totalorder %s289, 0
          %p291 = pneg %p290
          // Predicated region
          $region130: #{tpu_custom_call.1} parent=117 // pred_check
            _
          $region131: #{tpu_custom_call.1} parent=117 // pred_check_branch
            %293 = sbr.rel (%p290) target = $region133
          $region132: #{tpu_custom_call.1} parent=117 // pred_region
            %s294 = sand.u32 1, 7
            %s295 = ssub.s32 1, %s294
            %s296 = scalar_lea.vmem %s267, %s295
            %s297 = ssub.s32 1, %s294
            %s298 = scalar_lea.vmem %s268, %s297 [#allocation2]
            %s299 = sshllo.u32 0, %s294
            loop: start=0, step=1, limit=1
            $region134: #{tpu_custom_call.1} parent=132 // loop_pre_header
              _
            $region135: #{tpu_custom_call.1} parent=132 // loop_header
              %s301 = sphi 0, %s305
              %p302 = scmp.ge.s32.totalorder %s301, 1
              %s306 = sphi %s296, %s296
              %s307 = sphi %s298, %s298
            $region136: #{tpu_custom_call.1} parent=132 // loop_header_branch
              %304 = sbr.rel (%p302) target = $region140
            $region137: #{tpu_custom_call.1} parent=132 // loop_body
              %v308 = vld [vmem:[%s306] sm:%s299]
              %309 = vst [vmem:[%s307] sm:%s299] %v308
            $region138: #{tpu_custom_call.1} parent=132 // loop_footer
              %s305 = sadd.s32 1, %s301
            $region139: #{tpu_custom_call.1} parent=132 // loop_footer_branch
              %300 = sbr.rel target = $region135
            $region140: #{tpu_custom_call.1} parent=132 // loop_exit
              _
          $region133: #{tpu_custom_call.1} parent=117 // pred_fallthru
            _
        $region118: #{tpu_custom_call.1} parent=23 // pred_fallthru
          _
        // Predicated region
        $region119: #{tpu_custom_call.1} parent=23 // pred_check
          %p275 = pneg %p271
        $region120: #{tpu_custom_call.1} parent=23 // pred_check_branch
          %277 = sbr.rel (%p275) target = $region122
        $region121: #{tpu_custom_call.1} parent=23 // pred_region
          %s278 = sshllo.u32 0, 1
          loop: start=0, step=1, limit=1
          $region123: #{tpu_custom_call.1} parent=121 // loop_pre_header
            _
          $region124: #{tpu_custom_call.1} parent=121 // loop_header
            %s280 = sphi 0, %s284
            %p281 = scmp.ge.s32.totalorder %s280, 1
            %s285 = sphi %s267, %s267
            %s286 = sphi %s268, %s268
          $region125: #{tpu_custom_call.1} parent=121 // loop_header_branch
            %283 = sbr.rel (%p281) target = $region129
          $region126: #{tpu_custom_call.1} parent=121 // loop_body
            %v287 = vld [vmem:[%s285] sm:%s278]
            %288 = vst [vmem:[%s286] sm:%s278] %v287
          $region127: #{tpu_custom_call.1} parent=121 // loop_footer
            %s284 = sadd.s32 1, %s280
          $region128: #{tpu_custom_call.1} parent=121 // loop_footer_branch
            %279 = sbr.rel target = $region124
          $region129: #{tpu_custom_call.1} parent=121 // loop_exit
            _
        $region122: #{tpu_custom_call.1} parent=23 // pred_fallthru
          _
        // Predicated region
        $region141: #{tpu_custom_call.1} parent=23 // pred_check
          _
        $region142: #{tpu_custom_call.1} parent=23 // pred_check_branch
          %312 = sbr.rel (0) target = $region144
        $region143: #{tpu_custom_call.1} parent=23 // pred_region
          %313 = vsyncadd %s269, 16
        $region144: #{tpu_custom_call.1} parent=23 // pred_fallthru
          _
        %s314 = sadd.s32 %s120, 4
        %s315 = sld [smem:[#allocation5 + %s314]]
        %s316 = scalar_lea.vmem %s1, %s315
        %s317 = scalar_lea.vmem [#allocation2], 4
        %s318 = scalar_lea.sflag [#allocation3], 4
        %p320 = scmp.lt.u32.totalorder 1, 8
        %p321 = pneg %p320
        // Predicated region
        $region145: #{tpu_custom_call.1} parent=23 // pred_check
          _
        $region146: #{tpu_custom_call.1} parent=23 // pred_check_branch
          %323 = sbr.rel (%p320) target = $region148
        $region147: #{tpu_custom_call.1} parent=23 // pred_region
          %s338 = sand.u32 1, 7
          %p339 = scmp.eq.s32.totalorder %s338, 0
          %p340 = pneg %p339
          // Predicated region
          $region160: #{tpu_custom_call.1} parent=147 // pred_check
            _
          $region161: #{tpu_custom_call.1} parent=147 // pred_check_branch
            %342 = sbr.rel (%p339) target = $region163
          $region162: #{tpu_custom_call.1} parent=147 // pred_region
            %s343 = sand.u32 1, 7
            %s344 = ssub.s32 1, %s343
            %s345 = scalar_lea.vmem %s316, %s344
            %s346 = ssub.s32 1, %s343
            %s347 = scalar_lea.vmem %s317, %s346 [#allocation2]
            %s348 = sshllo.u32 0, %s343
            loop: start=0, step=1, limit=1
            $region164: #{tpu_custom_call.1} parent=162 // loop_pre_header
              _
            $region165: #{tpu_custom_call.1} parent=162 // loop_header
              %s350 = sphi 0, %s354
              %p351 = scmp.ge.s32.totalorder %s350, 1
              %s355 = sphi %s345, %s345
              %s356 = sphi %s347, %s347
            $region166: #{tpu_custom_call.1} parent=162 // loop_header_branch
              %353 = sbr.rel (%p351) target = $region170
            $region167: #{tpu_custom_call.1} parent=162 // loop_body
              %v357 = vld [vmem:[%s355] sm:%s348]
              %358 = vst [vmem:[%s356] sm:%s348] %v357
            $region168: #{tpu_custom_call.1} parent=162 // loop_footer
              %s354 = sadd.s32 1, %s350
            $region169: #{tpu_custom_call.1} parent=162 // loop_footer_branch
              %349 = sbr.rel target = $region165
            $region170: #{tpu_custom_call.1} parent=162 // loop_exit
              _
          $region163: #{tpu_custom_call.1} parent=147 // pred_fallthru
            _
        $region148: #{tpu_custom_call.1} parent=23 // pred_fallthru
          _
        // Predicated region
        $region149: #{tpu_custom_call.1} parent=23 // pred_check
          %p324 = pneg %p320
        $region150: #{tpu_custom_call.1} parent=23 // pred_check_branch
          %326 = sbr.rel (%p324) target = $region152
        $region151: #{tpu_custom_call.1} parent=23 // pred_region
          %s327 = sshllo.u32 0, 1
          loop: start=0, step=1, limit=1
          $region153: #{tpu_custom_call.1} parent=151 // loop_pre_header
            _
          $region154: #{tpu_custom_call.1} parent=151 // loop_header
            %s329 = sphi 0, %s333
            %p330 = scmp.ge.s32.totalorder %s329, 1
            %s334 = sphi %s316, %s316
            %s335 = sphi %s317, %s317
          $region155: #{tpu_custom_call.1} parent=151 // loop_header_branch
            %332 = sbr.rel (%p330) target = $region159
          $region156: #{tpu_custom_call.1} parent=151 // loop_body
            %v336 = vld [vmem:[%s334] sm:%s327]
            %337 = vst [vmem:[%s335] sm:%s327] %v336
          $region157: #{tpu_custom_call.1} parent=151 // loop_footer
            %s333 = sadd.s32 1, %s329
          $region158: #{tpu_custom_call.1} parent=151 // loop_footer_branch
            %328 = sbr.rel target = $region154
          $region159: #{tpu_custom_call.1} parent=151 // loop_exit
            _
        $region152: #{tpu_custom_call.1} parent=23 // pred_fallthru
          _
        // Predicated region
        $region171: #{tpu_custom_call.1} parent=23 // pred_check
          _
        $region172: #{tpu_custom_call.1} parent=23 // pred_check_branch
          %361 = sbr.rel (0) target = $region174
        $region173: #{tpu_custom_call.1} parent=23 // pred_region
          %362 = vsyncadd %s318, 16
        $region174: #{tpu_custom_call.1} parent=23 // pred_fallthru
          _
        %s363 = sadd.s32 %s120, 5
        %s364 = sld [smem:[#allocation5 + %s363]]
        %s365 = scalar_lea.vmem %s1, %s364
        %s366 = scalar_lea.vmem [#allocation2], 5
        %s367 = scalar_lea.sflag [#allocation3], 5
        %p369 = scmp.lt.u32.totalorder 1, 8
        %p370 = pneg %p369
        // Predicated region
        $region175: #{tpu_custom_call.1} parent=23 // pred_check
          _
        $region176: #{tpu_custom_call.1} parent=23 // pred_check_branch
          %372 = sbr.rel (%p369) target = $region178
        $region177: #{tpu_custom_call.1} parent=23 // pred_region
          %s387 = sand.u32 1, 7
          %p388 = scmp.eq.s32.totalorder %s387, 0
          %p389 = pneg %p388
          // Predicated region
          $region190: #{tpu_custom_call.1} parent=177 // pred_check
            _
          $region191: #{tpu_custom_call.1} parent=177 // pred_check_branch
            %391 = sbr.rel (%p388) target = $region193
          $region192: #{tpu_custom_call.1} parent=177 // pred_region
            %s392 = sand.u32 1, 7
            %s393 = ssub.s32 1, %s392
            %s394 = scalar_lea.vmem %s365, %s393
            %s395 = ssub.s32 1, %s392
            %s396 = scalar_lea.vmem %s366, %s395 [#allocation2]
            %s397 = sshllo.u32 0, %s392
            loop: start=0, step=1, limit=1
            $region194: #{tpu_custom_call.1} parent=192 // loop_pre_header
              _
            $region195: #{tpu_custom_call.1} parent=192 // loop_header
              %s399 = sphi 0, %s403
              %p400 = scmp.ge.s32.totalorder %s399, 1
              %s404 = sphi %s394, %s394
              %s405 = sphi %s396, %s396
            $region196: #{tpu_custom_call.1} parent=192 // loop_header_branch
              %402 = sbr.rel (%p400) target = $region200
            $region197: #{tpu_custom_call.1} parent=192 // loop_body
              %v406 = vld [vmem:[%s404] sm:%s397]
              %407 = vst [vmem:[%s405] sm:%s397] %v406
            $region198: #{tpu_custom_call.1} parent=192 // loop_footer
              %s403 = sadd.s32 1, %s399
            $region199: #{tpu_custom_call.1} parent=192 // loop_footer_branch
              %398 = sbr.rel target = $region195
            $region200: #{tpu_custom_call.1} parent=192 // loop_exit
              _
          $region193: #{tpu_custom_call.1} parent=177 // pred_fallthru
            _
        $region178: #{tpu_custom_call.1} parent=23 // pred_fallthru
          _
        // Predicated region
        $region179: #{tpu_custom_call.1} parent=23 // pred_check
          %p373 = pneg %p369
        $region180: #{tpu_custom_call.1} parent=23 // pred_check_branch
          %375 = sbr.rel (%p373) target = $region182
        $region181: #{tpu_custom_call.1} parent=23 // pred_region
          %s376 = sshllo.u32 0, 1
          loop: start=0, step=1, limit=1
          $region183: #{tpu_custom_call.1} parent=181 // loop_pre_header
            _
          $region184: #{tpu_custom_call.1} parent=181 // loop_header
            %s378 = sphi 0, %s382
            %p379 = scmp.ge.s32.totalorder %s378, 1
            %s383 = sphi %s365, %s365
            %s384 = sphi %s366, %s366
          $region185: #{tpu_custom_call.1} parent=181 // loop_header_branch
            %381 = sbr.rel (%p379) target = $region189
          $region186: #{tpu_custom_call.1} parent=181 // loop_body
            %v385 = vld [vmem:[%s383] sm:%s376]
            %386 = vst [vmem:[%s384] sm:%s376] %v385
          $region187: #{tpu_custom_call.1} parent=181 // loop_footer
            %s382 = sadd.s32 1, %s378
          $region188: #{tpu_custom_call.1} parent=181 // loop_footer_branch
            %377 = sbr.rel target = $region184
          $region189: #{tpu_custom_call.1} parent=181 // loop_exit
            _
        $region182: #{tpu_custom_call.1} parent=23 // pred_fallthru
          _
        // Predicated region
        $region201: #{tpu_custom_call.1} parent=23 // pred_check
          _
        $region202: #{tpu_custom_call.1} parent=23 // pred_check_branch
          %410 = sbr.rel (0) target = $region204
        $region203: #{tpu_custom_call.1} parent=23 // pred_region
          %411 = vsyncadd %s367, 16
        $region204: #{tpu_custom_call.1} parent=23 // pred_fallthru
          _
        %s412 = sadd.s32 %s120, 6
        %s413 = sld [smem:[#allocation5 + %s412]]
        %s414 = scalar_lea.vmem %s1, %s413
        %s415 = scalar_lea.vmem [#allocation2], 6
        %s416 = scalar_lea.sflag [#allocation3], 6
        %p418 = scmp.lt.u32.totalorder 1, 8
        %p419 = pneg %p418
        // Predicated region
        $region205: #{tpu_custom_call.1} parent=23 // pred_check
          _
        $region206: #{tpu_custom_call.1} parent=23 // pred_check_branch
          %421 = sbr.rel (%p418) target = $region208
        $region207: #{tpu_custom_call.1} parent=23 // pred_region
          %s436 = sand.u32 1, 7
          %p437 = scmp.eq.s32.totalorder %s436, 0
          %p438 = pneg %p437
          // Predicated region
          $region220: #{tpu_custom_call.1} parent=207 // pred_check
            _
          $region221: #{tpu_custom_call.1} parent=207 // pred_check_branch
            %440 = sbr.rel (%p437) target = $region223
          $region222: #{tpu_custom_call.1} parent=207 // pred_region
            %s441 = sand.u32 1, 7
            %s442 = ssub.s32 1, %s441
            %s443 = scalar_lea.vmem %s414, %s442
            %s444 = ssub.s32 1, %s441
            %s445 = scalar_lea.vmem %s415, %s444 [#allocation2]
            %s446 = sshllo.u32 0, %s441
            loop: start=0, step=1, limit=1
            $region224: #{tpu_custom_call.1} parent=222 // loop_pre_header
              _
            $region225: #{tpu_custom_call.1} parent=222 // loop_header
              %s448 = sphi 0, %s452
              %p449 = scmp.ge.s32.totalorder %s448, 1
              %s453 = sphi %s443, %s443
              %s454 = sphi %s445, %s445
            $region226: #{tpu_custom_call.1} parent=222 // loop_header_branch
              %451 = sbr.rel (%p449) target = $region230
            $region227: #{tpu_custom_call.1} parent=222 // loop_body
              %v455 = vld [vmem:[%s453] sm:%s446]
              %456 = vst [vmem:[%s454] sm:%s446] %v455
            $region228: #{tpu_custom_call.1} parent=222 // loop_footer
              %s452 = sadd.s32 1, %s448
            $region229: #{tpu_custom_call.1} parent=222 // loop_footer_branch
              %447 = sbr.rel target = $region225
            $region230: #{tpu_custom_call.1} parent=222 // loop_exit
              _
          $region223: #{tpu_custom_call.1} parent=207 // pred_fallthru
            _
        $region208: #{tpu_custom_call.1} parent=23 // pred_fallthru
          _
        // Predicated region
        $region209: #{tpu_custom_call.1} parent=23 // pred_check
          %p422 = pneg %p418
        $region210: #{tpu_custom_call.1} parent=23 // pred_check_branch
          %424 = sbr.rel (%p422) target = $region212
        $region211: #{tpu_custom_call.1} parent=23 // pred_region
          %s425 = sshllo.u32 0, 1
          loop: start=0, step=1, limit=1
          $region213: #{tpu_custom_call.1} parent=211 // loop_pre_header
            _
          $region214: #{tpu_custom_call.1} parent=211 // loop_header
            %s427 = sphi 0, %s431
            %p428 = scmp.ge.s32.totalorder %s427, 1
            %s432 = sphi %s414, %s414
            %s433 = sphi %s415, %s415
          $region215: #{tpu_custom_call.1} parent=211 // loop_header_branch
            %430 = sbr.rel (%p428) target = $region219
          $region216: #{tpu_custom_call.1} parent=211 // loop_body
            %v434 = vld [vmem:[%s432] sm:%s425]
            %435 = vst [vmem:[%s433] sm:%s425] %v434
          $region217: #{tpu_custom_call.1} parent=211 // loop_footer
            %s431 = sadd.s32 1, %s427
          $region218: #{tpu_custom_call.1} parent=211 // loop_footer_branch
            %426 = sbr.rel target = $region214
          $region219: #{tpu_custom_call.1} parent=211 // loop_exit
            _
        $region212: #{tpu_custom_call.1} parent=23 // pred_fallthru
          _
        // Predicated region
        $region231: #{tpu_custom_call.1} parent=23 // pred_check
          _
        $region232: #{tpu_custom_call.1} parent=23 // pred_check_branch
          %459 = sbr.rel (0) target = $region234
        $region233: #{tpu_custom_call.1} parent=23 // pred_region
          %460 = vsyncadd %s416, 16
        $region234: #{tpu_custom_call.1} parent=23 // pred_fallthru
          _
        %s461 = sadd.s32 %s120, 7
        %s462 = sld [smem:[#allocation5 + %s461]]
        %s463 = scalar_lea.vmem %s1, %s462
        %s464 = scalar_lea.vmem [#allocation2], 7
        %s465 = scalar_lea.sflag [#allocation3], 7
        %p467 = scmp.lt.u32.totalorder 1, 8
        %p468 = pneg %p467
        // Predicated region
        $region235: #{tpu_custom_call.1} parent=23 // pred_check
          _
        $region236: #{tpu_custom_call.1} parent=23 // pred_check_branch
          %470 = sbr.rel (%p467) target = $region238
        $region237: #{tpu_custom_call.1} parent=23 // pred_region
          %s485 = sand.u32 1, 7
          %p486 = scmp.eq.s32.totalorder %s485, 0
          %p487 = pneg %p486
          // Predicated region
          $region250: #{tpu_custom_call.1} parent=237 // pred_check
            _
          $region251: #{tpu_custom_call.1} parent=237 // pred_check_branch
            %489 = sbr.rel (%p486) target = $region253
          $region252: #{tpu_custom_call.1} parent=237 // pred_region
            %s490 = sand.u32 1, 7
            %s491 = ssub.s32 1, %s490
            %s492 = scalar_lea.vmem %s463, %s491
            %s493 = ssub.s32 1, %s490
            %s494 = scalar_lea.vmem %s464, %s493 [#allocation2]
            %s495 = sshllo.u32 0, %s490
            loop: start=0, step=1, limit=1
            $region254: #{tpu_custom_call.1} parent=252 // loop_pre_header
              _
            $region255: #{tpu_custom_call.1} parent=252 // loop_header
              %s497 = sphi 0, %s501
              %p498 = scmp.ge.s32.totalorder %s497, 1
              %s502 = sphi %s492, %s492
              %s503 = sphi %s494, %s494
            $region256: #{tpu_custom_call.1} parent=252 // loop_header_branch
              %500 = sbr.rel (%p498) target = $region260
            $region257: #{tpu_custom_call.1} parent=252 // loop_body
              %v504 = vld [vmem:[%s502] sm:%s495]
              %505 = vst [vmem:[%s503] sm:%s495] %v504
            $region258: #{tpu_custom_call.1} parent=252 // loop_footer
              %s501 = sadd.s32 1, %s497
            $region259: #{tpu_custom_call.1} parent=252 // loop_footer_branch
              %496 = sbr.rel target = $region255
            $region260: #{tpu_custom_call.1} parent=252 // loop_exit
              _
          $region253: #{tpu_custom_call.1} parent=237 // pred_fallthru
            _
        $region238: #{tpu_custom_call.1} parent=23 // pred_fallthru
          _
        // Predicated region
        $region239: #{tpu_custom_call.1} parent=23 // pred_check
          %p471 = pneg %p467
        $region240: #{tpu_custom_call.1} parent=23 // pred_check_branch
          %473 = sbr.rel (%p471) target = $region242
        $region241: #{tpu_custom_call.1} parent=23 // pred_region
          %s474 = sshllo.u32 0, 1
          loop: start=0, step=1, limit=1
          $region243: #{tpu_custom_call.1} parent=241 // loop_pre_header
            _
          $region244: #{tpu_custom_call.1} parent=241 // loop_header
            %s476 = sphi 0, %s480
            %p477 = scmp.ge.s32.totalorder %s476, 1
            %s481 = sphi %s463, %s463
            %s482 = sphi %s464, %s464
          $region245: #{tpu_custom_call.1} parent=241 // loop_header_branch
            %479 = sbr.rel (%p477) target = $region249
          $region246: #{tpu_custom_call.1} parent=241 // loop_body
            %v483 = vld [vmem:[%s481] sm:%s474]
            %484 = vst [vmem:[%s482] sm:%s474] %v483
          $region247: #{tpu_custom_call.1} parent=241 // loop_footer
            %s480 = sadd.s32 1, %s476
          $region248: #{tpu_custom_call.1} parent=241 // loop_footer_branch
            %475 = sbr.rel target = $region244
          $region249: #{tpu_custom_call.1} parent=241 // loop_exit
            _
        $region242: #{tpu_custom_call.1} parent=23 // pred_fallthru
          _
        // Predicated region
        $region261: #{tpu_custom_call.1} parent=23 // pred_check
          _
        $region262: #{tpu_custom_call.1} parent=23 // pred_check_branch
          %508 = sbr.rel (0) target = $region264
        $region263: #{tpu_custom_call.1} parent=23 // pred_region
          %509 = vsyncadd %s465, 16
        $region264: #{tpu_custom_call.1} parent=23 // pred_fallthru
          _
        %511 = dma.done [#allocation3], 16
        %513 = dma.done %s171, 16
        %515 = dma.done %s220, 16
        %517 = dma.done %s269, 16
        %519 = dma.done %s318, 16
        %521 = dma.done %s367, 16
        %523 = dma.done %s416, 16
        %525 = dma.done %s465, 16
        %v526 = vld [vmem:[#allocation2] sm:$0xff]
        %v527 = vld [vmem:[%s119] sm:$0xff]
        %v528 = vadd.f32 %v526, %v527
        %vm529 = vcmask 261120
        %530 = vst.msk [vmem:[%s115] sm:$0xff] %vm529, %v528
        %s531 = sand.u32 %s57, 1
        %s532 = scalar_lea.sflag [#allocation7], %s531
        %s533 = sand.u32 %s57, 1
        %s534 = smul.addr %s533, 8
        %s535 = scalar_lea.vmem [#allocation6], %s534
        // Predicated region
        $region265: #{tpu_custom_call.1} parent=23 // pred_check
          %p536 = pneg %p67
        $region266: #{tpu_custom_call.1} parent=23 // pred_check_branch
          %538 = sbr.rel (%p536) target = $region268
        $region267: #{tpu_custom_call.1} parent=23 // pred_region
          %s540 = ssub.s32 128, 128
          %541 = vsyncadd %s532, %s540
          %s542 = smul.addr %s23, 128
          %s543 = scalar_lea.hbm %s3, %s542
          %s545 = sshll.u32 %s535, 4
          %s546 = int_to_ptr.vmem [resolvable:$true] %s545
          %548 = dma.vmem_to_hbm [thread:$0]  %s546, 128, %s543, %s532
        $region268: #{tpu_custom_call.1} parent=23 // pred_fallthru
          _
      $region24: #{tpu_custom_call.1} parent=5 // pred_fallthru
        _
      %p549 = scmp.le.s32.totalorder 2, %s18
      // Predicated region
      $region269: #{tpu_custom_call.1} parent=5 // pred_check
        %p550 = pneg %p549
      $region270: #{tpu_custom_call.1} parent=5 // pred_check_branch
        %552 = sbr.rel (%p550) target = $region272
      $region271: #{tpu_custom_call.1} parent=5 // pred_region
        %s553 = ssub.s32 %s18, 2
        // Predicated region
        $region273: #{tpu_custom_call.1} parent=271 // pred_check
          %p554 = pneg %p73
        $region274: #{tpu_custom_call.1} parent=271 // pred_check_branch
          %556 = sbr.rel (%p554) target = $region276
        $region275: #{tpu_custom_call.1} parent=271 // pred_region
          %s557 = sand.u32 %s58, 1
          %s558 = scalar_lea.sflag [#allocation7], %s557
          %s559 = sand.u32 %s58, 1
          %s560 = smul.addr %s559, 8
          %s561 = scalar_lea.vmem [#allocation6], %s560
          %562 = dma.done %s558, 128
        $region276: #{tpu_custom_call.1} parent=271 // pred_fallthru
          _
      $region272: #{tpu_custom_call.1} parent=5 // pred_fallthru
        _
    $region6: #{tpu_custom_call.1} parent=1 // loop_footer
      %s22 = sadd.s32 1, %s18
    $region7: #{tpu_custom_call.1} parent=1 // loop_footer_branch
      %17 = sbr.rel target = $region3
    $region8: #{tpu_custom_call.1} parent=1 // loop_exit
      _
    %563 = vsyncpa [#allocation7], 1
    %s564 = scalar_lea.sflag [#allocation7], 1
    %565 = vsyncpa %s564, 1
  %566 = vsyncmov [#allocation3]
  %s567 = vpop.sfrf %566
  %p568 = scmp.eq.s32.totalorder %s567, 0
  %p569 = pneg %p568
  %571 = shalt.err (%p569)
  %s572 = scalar_lea.sflag [#allocation3], 1
  %573 = vsyncmov %s572
  %s574 = vpop.sfrf %573
  %p575 = scmp.eq.s32.totalorder %s574, 0
  %p576 = pneg %p575
  %578 = shalt.err (%p576)
  %s579 = scalar_lea.sflag [#allocation3], 2
  %580 = vsyncmov %s579
  %s581 = vpop.sfrf %580
  %p582 = scmp.eq.s32.totalorder %s581, 0
  %p583 = pneg %p582
  %585 = shalt.err (%p583)
  %s586 = scalar_lea.sflag [#allocation3], 3
  %587 = vsyncmov %s586
  %s588 = vpop.sfrf %587
  %p589 = scmp.eq.s32.totalorder %s588, 0
  %p590 = pneg %p589
  %592 = shalt.err (%p590)
  %s593 = scalar_lea.sflag [#allocation3], 4
  %594 = vsyncmov %s593
  %s595 = vpop.sfrf %594
  %p596 = scmp.eq.s32.totalorder %s595, 0
  %p597 = pneg %p596
  %599 = shalt.err (%p597)
  %s600 = scalar_lea.sflag [#allocation3], 5
  %601 = vsyncmov %s600
  %s602 = vpop.sfrf %601
  %p603 = scmp.eq.s32.totalorder %s602, 0
  %p604 = pneg %p603
  %606 = shalt.err (%p604)
  %s607 = scalar_lea.sflag [#allocation3], 6
  %608 = vsyncmov %s607
  %s609 = vpop.sfrf %608
  %p610 = scmp.eq.s32.totalorder %s609, 0
  %p611 = pneg %p610
  %613 = shalt.err (%p611)
  %s614 = scalar_lea.sflag [#allocation3], 7
  %615 = vsyncmov %s614
  %s616 = vpop.sfrf %615
  %p617 = scmp.eq.s32.totalorder %s616, 0
  %p618 = pneg %p617
  %620 = shalt.err (%p618)

</llo_original>
